<compile_context>
chip_gen: v5e
topology: v5e:2x2
jax: 0.10.0
libtpu: 0.0.40
codegen_flags: <defaults>
</compile_context>

<pallas_src>
from functools import partial

import jax
import jax.numpy as jnp
from jax.experimental import pallas as pl
from jax.experimental.pallas import tpu as pltpu

_LN_EPS = 1e-5
_LANE = 128
_MIB = 1024 * 1024


# ---------------------------------------------------------------------------
# Small helpers
# ---------------------------------------------------------------------------
def _round_up(a, m):
    return ((a + m - 1) // m) * m


def _vmem_budget():
    """Scoped-VMEM limit + working budget derived from the chip's physical VMEM."""
    try:
        cap = int(pltpu.get_tpu_info().vmem_capacity_bytes)
    except Exception:
        cap = 64 * _MIB
    # Leave headroom for compiler scratch / semaphores / spills (never the full cap).
    limit = max(min(cap - 12 * _MIB, (cap * 7) // 8), 32 * _MIB)
    budget = (limit * 3) // 4
    return limit, budget


def _pick_tm(M, sub):
    """Row tile: minimize padded rows, then prefer >= 2 grid steps (v7x megacore),
    then the largest tile (less per-step overhead)."""
    cands = [t for t in (256, 128, 64, 32, 16, 8) if t % sub == 0]
    pads = {t: _round_up(M, t) for t in cands}
    best = min(pads.values())
    ok = [t for t in cands if pads[t] <= int(best * 1.08)]
    ok.sort(key=lambda t: (0 if pads[t] // t >= 2 else 1, -t))
    return ok[0]


def _pick_tile(total, cap):
    """Largest 128-multiple divisor of `total` <= cap; prefer 256-aligned tiles
    (256x256 MXUs on v6e/v7x) unless the 128-aligned choice is > 2x larger."""
    if total <= cap:
        return total
    d128, d256 = _LANE, 0
    t = max((cap // _LANE) * _LANE, _LANE)
    while t >= _LANE:
        if total % t == 0:
            d128 = max(d128, t)
            if t % 256 == 0:
                d256 = max(d256, t)
        t -= _LANE
    return d256 if d256 * 2 >= d128 else d128


def _pad2(a, rows, cols):
    r, c = a.shape
    if (r, c) == (rows, cols):
        return a
    return jnp.pad(a, ((0, rows - r), (0, cols - c)))


def _ln(y, g, b, true_d):
    """LayerNorm over the last axis of a zero-padded row.

    Padded lanes of y / g / b are exactly zero, so sums over the padded width equal
    sums over the true width; dividing by `true_d` gives correct statistics, and
    zero gamma/beta keeps padded lanes at zero. Variance is clamped >= 0 to guard
    against catastrophic cancellation driving rsqrt to NaN.
    """
    inv_d = 1.0 / float(true_d)
    mean = jnp.sum(y, axis=-1, keepdims=True) * inv_d
    msq = jnp.sum(y * y, axis=-1, keepdims=True) * inv_d
    var = jnp.maximum(msq - mean * mean, 0.0)
    return (y - mean) * jax.lax.rsqrt(var + _LN_EPS) * g + b


def _plan_layer(tm, K_pad, N_pad, itmi, itmw, itmo, budget, want_in_norm, want_out_norm):
    """Decide which LayerNorm folds fit the VMEM budget for one tiled layer."""
    def fit(tk, tn):
        return (2 * tm * tk * itmi + 2 * tk * tn * itmw
                + 2 * tm * tn * itmo + tm * tn * 4) <= budget
    in_n, out_n = want_in_norm, want_out_norm
    if in_n and out_n and not fit(K_pad, N_pad):
        in_n = False                      # prefer keeping the epilogue LN fused
    if in_n and not fit(K_pad, _LANE):
        in_n = False
    if out_n and not fit(_LANE, N_pad):
        out_n = False
    return in_n, out_n


# ---------------------------------------------------------------------------
# Kernels
# ---------------------------------------------------------------------------
def _mlp_fused_kernel(*refs, num_layers, norm_cnt, use_norm, init_activate, ln_true_dims):
    """Whole MLP for one row tile: all weights resident in VMEM, one output write.
    Inter-layer activations stay in the weight dtype; LN/bias/ReLU run in f32."""
    i = 0
    x_ref = refs[i]; i += 1
    w_refs = refs[i:i + num_layers]; i += num_layers
    b_refs = refs[i:i + num_layers]; i += num_layers
    g_refs = refs[i:i + norm_cnt]; i += norm_cnt
    be_refs = refs[i:i + norm_cnt]; i += norm_cnt
    o_ref = refs[i]

    comp_dtype = w_refs[0].dtype
    y = x_ref[...]
    ni = 0
    if init_activate:
        yf = y.astype(jnp.float32)
        if use_norm:
            yf = _ln(yf, g_refs[ni][...].astype(jnp.float32),
                     be_refs[ni][...].astype(jnp.float32), ln_true_dims[ni])
            ni += 1
        yf = jnp.maximum(yf, 0.0)
        y = yf.astype(comp_dtype)
    else:
        y = y.astype(comp_dtype)

    for li in range(num_layers):
        w = w_refs[li][...]
        acc = jnp.dot(y.astype(w.dtype), w, preferred_element_type=jnp.float32)
        acc = acc + b_refs[li][...].astype(jnp.float32)
        if li != num_layers - 1:
            if use_norm:
                acc = _ln(acc, g_refs[ni][...].astype(jnp.float32),
                          be_refs[ni][...].astype(jnp.float32), ln_true_dims[ni])
                ni += 1
            acc = jnp.maximum(acc, 0.0)
            y = acc.astype(comp_dtype)     # keep inter-layer activation narrow
        else:
            o_ref[...] = acc.astype(o_ref.dtype)


def _linear_tiled_kernel(x_ref, w_ref, b_ref, *rest,
                         in_norm, in_relu, out_norm, out_relu, true_k, true_n):
    """(tm,tk)x(tk,tn) matmul with K-axis f32 accumulation.
    Prologue optionally applies LN/ReLU to the x tile (fused init_activate);
    epilogue applies bias / LN / ReLU."""
    idx = 0
    if in_norm:
        gi_ref, bi_ref = rest[idx], rest[idx + 1]; idx += 2
    if out_norm:
        go_ref, bo_ref = rest[idx], rest[idx + 1]; idx += 2
    o_ref = rest[idx]
    acc_ref = rest[idx + 1]

    k = pl.program_id(2)

    @pl.when(k == 0)
    def _():
        acc_ref[...] = jnp.zeros_like(acc_ref)

    w = w_ref[...]
    x = x_ref[...]
    if in_norm or in_relu:
        xf = x.astype(jnp.float32)
        if in_norm:
            # Prologue LN requires tk == K_pad (full padded feature row resident).
            xf = _ln(xf, gi_ref[...].astype(jnp.float32),
                     bi_ref[...].astype(jnp.float32), true_k)
        if in_relu:
            xf = jnp.maximum(xf, 0.0)
        x = xf
    # Feed the MXU in the weight dtype (full rate for bf16); accumulate f32.
    acc_ref[...] += jnp.dot(x.astype(w.dtype), w, preferred_element_type=jnp.float32)

    @pl.when(k == pl.num_programs(2) - 1)
    def _():
        y = acc_ref[...] + b_ref[...].astype(jnp.float32)
        if out_norm:
            # Epilogue LN requires tn == N_pad (full padded output row resident).
            y = _ln(y, go_ref[...].astype(jnp.float32),
                    bo_ref[...].astype(jnp.float32), true_n)
        if out_relu:
            y = jnp.maximum(y, 0.0)
        o_ref[...] = y.astype(o_ref.dtype)


def _act_kernel(x_ref, *rest, apply_norm, true_d):
    """Standalone LayerNorm -> ReLU (fallback when it cannot be fused into a matmul)."""
    if apply_norm:
        g_ref, be_ref, o_ref = rest
    else:
        (o_ref,) = rest
    y = x_ref[...].astype(jnp.float32)
    if apply_norm:
        y = _ln(y, g_ref[...].astype(jnp.float32),
                be_ref[...].astype(jnp.float32), true_d)
    y = jnp.maximum(y, 0.0)
    o_ref[...] = y.astype(o_ref.dtype)


# ---------------------------------------------------------------------------
# pallas_call wrappers
# ---------------------------------------------------------------------------
def _fused_mlp_call(x_p, w_p, b_p, g_p, be_p, *, use_norm, init_activate,
                    ln_true_dims, tm, vmem_limit):
    M_pad, D0 = x_p.shape
    L = len(w_p)
    Nlast = w_p[-1].shape[1]
    kernel = partial(_mlp_fused_kernel, num_layers=L, norm_cnt=len(g_p),
                     use_norm=use_norm, init_activate=init_activate,
                     ln_true_dims=tuple(ln_true_dims))

    in_specs = [pl.BlockSpec((tm, D0), lambda i: (i, 0))]
    # Weight/bias/gamma/beta blocks have constant index maps (resident across the
    # M grid). Single-buffering them (pl.Buffered(1)) would halve their VMEM cost;
    # left out pending validation, budget conservatively assumes double buffers.
    in_specs += [pl.BlockSpec(w.shape, lambda i: (0, 0)) for w in w_p]
    in_specs += [pl.BlockSpec((1, b.shape[1]), lambda i: (0, 0)) for b in b_p]
    in_specs += [pl.BlockSpec((1, g.shape[1]), lambda i: (0, 0)) for g in g_p]
    in_specs += [pl.BlockSpec((1, g.shape[1]), lambda i: (0, 0)) for g in be_p]

    itm_x = x_p.dtype.itemsize
    itm_w = w_p[0].dtype.itemsize
    flops = 2 * M_pad * sum(int(w.shape[0]) * int(w.shape[1]) for w in w_p)
    bytes_accessed = int(x_p.size * itm_x
                         + sum(int(w.size) for w in w_p) * itm_w
                         + sum(int(b.size) * 4 for b in b_p)
                         + M_pad * Nlast * itm_x)

    return pl.pallas_call(
        kernel,
        out_shape=jax.ShapeDtypeStruct((M_pad, Nlast), x_p.dtype),
        grid_spec=pltpu.PrefetchScalarGridSpec(
            num_scalar_prefetch=0,
            grid=(M_pad // tm,),
            in_specs=in_specs,
            out_specs=pl.BlockSpec((tm, Nlast), lambda i: (i, 0)),
        ),
        compiler_params=pltpu.CompilerParams(
            dimension_semantics=("parallel",),
            vmem_limit_bytes=vmem_limit),
        cost_estimate=pl.CostEstimate(flops=flops, transcendentals=0,
                                      bytes_accessed=bytes_accessed),
    )(x_p, *w_p, *b_p, *g_p, *be_p)


def _linear_tiled_call(x_p, w_p, b_p, gi, bi, go, bo, *,
                       in_norm, in_relu, out_norm, out_relu,
                       true_k, true_n, tm, out_dtype, vmem_limit, budget):
    M_pad, K_pad = x_p.shape
    N_pad = w_p.shape[1]
    itmi = x_p.dtype.itemsize
    itmw = w_p.dtype.itemsize
    itmo = jnp.dtype(out_dtype).itemsize

    # Pinned tiles: prologue LN needs the whole K row, epilogue LN the whole N row.
    tn = N_pad if out_norm else _pick_tile(N_pad, 1024)
    tk = K_pad if in_norm else _pick_tile(K_pad, 512)

    def footprint(tk_, tn_):   # double-buffered x/w/out tiles + f32 accumulator
        return (2 * tm * tk_ * itmi + 2 * tk_ * tn_ * itmw
                + 2 * tm * tn_ * itmo + tm * tn_ * 4)

    while footprint(tk, tn) > budget:
        if not in_norm and tk > _LANE:
            tk = _pick_tile(K_pad, tk // 2)
        elif not out_norm and tn > _LANE:
            tn = _pick_tile(N_pad, tn // 2)
        else:
            break

    kernel = partial(_linear_tiled_kernel, in_norm=in_norm, in_relu=in_relu,
                     out_norm=out_norm, out_relu=out_relu,
                     true_k=true_k, true_n=true_n)

    in_specs = [
        pl.BlockSpec((tm, tk), lambda i, j, k: (i, k)),
        pl.BlockSpec((tk, tn), lambda i, j, k: (k, j)),
        pl.BlockSpec((1, tn), lambda i, j, k: (0, j)),
    ]
    args = [x_p, w_p, b_p]
    if in_norm:
        in_specs += [pl.BlockSpec((1, tk), lambda i, j, k: (0, k)),
                     pl.BlockSpec((1, tk), lambda i, j, k: (0, k))]
        args += [gi, bi]
    if out_norm:
        in_specs += [pl.BlockSpec((1, tn), lambda i, j, k: (0, j)),
                     pl.BlockSpec((1, tn), lambda i, j, k: (0, j))]
        args += [go, bo]

    flops = 2 * M_pad * K_pad * N_pad
    bytes_accessed = int(M_pad * K_pad * itmi + K_pad * N_pad * itmw
                         + M_pad * N_pad * itmo)

    return pl.pallas_call(
        kernel,
        out_shape=jax.ShapeDtypeStruct((M_pad, N_pad), out_dtype),
        grid_spec=pltpu.PrefetchScalarGridSpec(
            num_scalar_prefetch=0,
            grid=(M_pad // tm, N_pad // tn, K_pad // tk),
            in_specs=in_specs,
            out_specs=pl.BlockSpec((tm, tn), lambda i, j, k: (i, j)),
            scratch_shapes=[pltpu.VMEM((tm, tn), jnp.float32)],
        ),
        compiler_params=pltpu.CompilerParams(
            dimension_semantics=("parallel", "parallel", "arbitrary"),
            vmem_limit_bytes=vmem_limit),
        cost_estimate=pl.CostEstimate(flops=flops, transcendentals=0,
                                      bytes_accessed=bytes_accessed),
    )(*args)


def _act_call(x_p, g_p, be_p, *, apply_norm, true_d, tm, out_dtype, vmem_limit):
    M_pad, D = x_p.shape
    kernel = partial(_act_kernel, apply_norm=apply_norm, true_d=true_d)
    in_specs = [pl.BlockSpec((tm, D), lambda i: (i, 0))]
    args = [x_p]
    if apply_norm:
        in_specs += [pl.BlockSpec((1, D), lambda i: (0, 0)),
                     pl.BlockSpec((1, D), lambda i: (0, 0))]
        args += [g_p, be_p]
    return pl.pallas_call(
        kernel,
        out_shape=jax.ShapeDtypeStruct((M_pad, D), out_dtype),
        grid_spec=pltpu.PrefetchScalarGridSpec(
            num_scalar_prefetch=0,
            grid=(M_pad // tm,),
            in_specs=in_specs,
            out_specs=pl.BlockSpec((tm, D), lambda i: (i, 0)),
        ),
        compiler_params=pltpu.CompilerParams(
            dimension_semantics=("parallel",),
            vmem_limit_bytes=vmem_limit),
    )(*args)


# ---------------------------------------------------------------------------
# Parameter construction (mirrors MLP.__init__ / reset_params)
# ---------------------------------------------------------------------------
def init_mlp_params(key, input_d, hidden_d, output_d, num_layers, norm, init_activate):
    if num_layers == 1:
        dims = [(input_d, output_d)]
    else:
        dims = [(input_d, hidden_d)]
        dims += [(hidden_d, hidden_d)] * (num_layers - 2)
        dims += [(hidden_d, output_d)]

    weights, biases = [], []
    for din, dout in dims:
        key, sub = jax.random.split(key)
        std = (2.0 / (din + dout)) ** 0.5                       # xavier_normal_, gain=1
        weights.append(std * jax.random.normal(sub, (din, dout), jnp.float32))  # transposed
        biases.append(jnp.zeros((1, dout), jnp.float32))        # constant_(bias, 0)

    norm_cnt = num_layers - 1 + int(init_activate)
    if norm == "layer":
        gammas = [jnp.ones((1, hidden_d), jnp.float32) for _ in range(norm_cnt)]
        betas = [jnp.zeros((1, hidden_d), jnp.float32) for _ in range(norm_cnt)]
    else:
        gammas, betas = [], []
    return {"weights": weights, "biases": biases, "gammas": gammas, "betas": betas}


# ---------------------------------------------------------------------------
# Forward pass (matches MLP.forward in eval mode)
# ---------------------------------------------------------------------------
def mlp_forward(x, params, *, norm, init_activate, force_tiled=False):
    if norm == "batch":
        # TODO(synk): BatchNorm1d (running-stats) path not implemented.
        raise NotImplementedError("norm='batch' not implemented")
    use_norm = norm == "layer"

    weights, biases = params["weights"], params["biases"]
    gammas, betas = params["gammas"], params["betas"]
    L = len(weights)
    M, D0 = x.shape
    out_d = int(weights[-1].shape[1])
    comp_dtype = weights[0].dtype              # MXU-operand / inter-layer activation dtype
    itm_w = jnp.dtype(comp_dtype).itemsize

    vmem_limit, budget = _vmem_budget()

    # ---- row tile: minimize padding waste, keep >=2 parallel steps for v7x megacore ----
    min_item = min(x.dtype.itemsize, itm_w)
    sub = 8 if min_item >= 4 else (16 if min_item == 2 else 32)
    tm = _pick_tm(M, sub)
    M_pad = _round_up(M, tm)

    # ---- lane-dense feature padding ----
    dims = [D0] + [int(w.shape[1]) for w in weights]
    dims_p = [_round_up(d, _LANE) for d in dims]

    x_p = _pad2(x, M_pad, dims_p[0])
    w_p = [_pad2(weights[i], dims_p[i], dims_p[i + 1]) for i in range(L)]
    b_p = [_pad2(biases[i], 1, dims_p[i + 1]) for i in range(L)]

    # norm application points (forward order): [input if init_activate] + hidden outputs
    ln_true = ([dims[0]] if init_activate else []) + [dims[i + 1] for i in range(L - 1)]
    ln_pad = ([dims_p[0]] if init_activate else []) + [dims_p[i + 1] for i in range(L - 1)]
    if use_norm:
        g_p = [_pad2(gammas[i], 1, ln_pad[i]) for i in range(len(ln_true))]
        be_p = [_pad2(betas[i], 1, ln_pad[i]) for i in range(len(ln_true))]
    else:
        g_p, be_p = [], []

    # ---- fully-fused (weights resident) vs. scalable tiled path ----
    weight_bytes = sum(dims_p[i] * dims_p[i + 1] for i in range(L)) * itm_w
    io_bytes = tm * (dims_p[0] + dims_p[-1]) * x.dtype.itemsize
    act_bytes = 3 * tm * max(dims_p) * 4           # live f32 intermediates in the body
    fused_fits = (2 * weight_bytes + 2 * io_bytes + act_bytes) < budget

    if fused_fits and not force_tiled:
        out_p = _fused_mlp_call(x_p, w_p, b_p, g_p, be_p,
                                use_norm=use_norm, init_activate=init_activate,
                                ln_true_dims=ln_true, tm=tm, vmem_limit=vmem_limit)
        return out_p[:M, :out_d]

    # ---- per-layer tiled path ----
    itm_x = max(x.dtype.itemsize, itm_w)
    plans = []
    for i in range(L):
        last = i == L - 1
        want_in = (i == 0) and init_activate and use_norm
        want_out = use_norm and not last
        out_dt = x.dtype if last else comp_dtype
        in_n, out_n = _plan_layer(tm, dims_p[i], dims_p[i + 1],
                                  itm_x, itm_w, jnp.dtype(out_dt).itemsize,
                                  budget, want_in, want_out)
        plans.append((in_n, out_n, want_out, out_dt))

    y = x_p
    ni = 0
    in_relu0 = bool(init_activate)
    if init_activate and use_norm:
        if not plans[0][0]:
            # Prologue fold infeasible: standalone LayerNorm + ReLU pass.
            y = _act_call(y, g_p[0], be_p[0], apply_norm=True, true_d=ln_true[0],
                          tm=tm, out_dtype=comp_dtype, vmem_limit=vmem_limit)
            in_relu0 = False
        ni = 1

    for i in range(L):
        in_n, out_n, want_out, out_dt = plans[i]
        last = i == L - 1
        in_r = in_relu0 if i == 0 else False
        out_r = (not last) and (out_n or not use_norm)
        y = _linear_tiled_call(
            y, w_p[i], b_p[i],
            g_p[0] if in_n else None, be_p[0] if in_n else None,
            g_p[ni] if out_n else None, be_p[ni] if out_n else None,
            in_norm=in_n, in_relu=in_r, out_norm=out_n, out_relu=out_r,
            true_k=dims[i], true_n=dims[i + 1],
            tm=tm, out_dtype=out_dt, vmem_limit=vmem_limit, budget=budget)
        if want_out and not out_n:
            # LN did not fit the matmul epilogue (tn == N_pad too large): separate pass.
            y = _act_call(y, g_p[ni], be_p[ni], apply_norm=True, true_d=dims[i + 1],
                          tm=tm, out_dtype=comp_dtype, vmem_limit=vmem_limit)
        if want_out:
            ni += 1

    return y[:M, :out_d]


# Pure-JAX reference for verification.
def mlp_forward_ref(x, params, *, norm, init_activate):
    def ln(v, g, b):
        m = jnp.mean(v, -1, keepdims=True)
        va = jnp.mean((v - m) ** 2, -1, keepdims=True)
        return (v - m) / jnp.sqrt(va + _LN_EPS) * g + b

    use_norm = norm == "layer"
    ni = 0
    if init_activate:
        if use_norm:
            x = ln(x, params["gammas"][ni], params["betas"][ni]); ni += 1
        x = jnp.maximum(x, 0.0)
    n = len(params["weights"])
    for i in range(n):
        x = x @ params["weights"][i] + params["biases"][i]
        if i != n - 1:
            if use_norm:
                x = ln(x, params["gammas"][ni], params["betas"][ni]); ni += 1
            x = jnp.maximum(x, 0.0)
    return x


if __name__ == "__main__":
    # input_d == hidden_d so init_activate's LayerNorm(hidden_d) is valid,
    # exactly as the PyTorch module requires.
    batch, input_d, hidden_d, output_d = 16, 32, 32, 16
    num_layers, dropout, norm, init_activate = 3, 0.5, "layer", True

    key = jax.random.PRNGKey(0)
    key, kx, kp = jax.random.split(key, 3)
    x = jax.random.normal(kx, (batch, input_d), jnp.float32)
    params = init_mlp_params(kp, input_d, hidden_d, output_d, num_layers, norm, init_activate)
    ref = mlp_forward_ref(x, params, norm=norm, init_activate=init_activate)

    # Path 1: fully-fused single-kernel MLP (all weights resident in VMEM).
    out_fused = jax.block_until_ready(
        mlp_forward(x, params, norm=norm, init_activate=init_activate))
    assert out_fused.shape == (batch, output_d)
    assert jnp.allclose(out_fused, ref, atol=1e-4, rtol=1e-4)

    # Path 2: per-layer M/N/K-tiled kernels (f32 accumulator, fused init-LN prologue).
    out_tiled = jax.block_until_ready(
        mlp_forward(x, params, norm=norm, init_activate=init_activate, force_tiled=True))
    assert jnp.allclose(out_tiled, ref, atol=1e-4, rtol=1e-4)

    # norm='none', no init activation (both paths).
    params2 = init_mlp_params(kp, input_d, hidden_d, output_d, num_layers, "none", False)
    ref2 = mlp_forward_ref(x, params2, norm="none", init_activate=False)
    out2 = jax.block_until_ready(mlp_forward(x, params2, norm="none", init_activate=False))
    assert jnp.allclose(out2, ref2, atol=1e-4, rtol=1e-4)
    out2t = jax.block_until_ready(
        mlp_forward(x, params2, norm="none", init_activate=False, force_tiled=True))
    assert jnp.allclose(out2t, ref2, atol=1e-4, rtol=1e-4)

    # norm='none' with init_activate=True (exercises the folded input-ReLU prologue).
    params3 = init_mlp_params(kp, input_d, hidden_d, output_d, num_layers, "none", True)
    ref3 = mlp_forward_ref(x, params3, norm="none", init_activate=True)
    out3t = jax.block_until_ready(
        mlp_forward(x, params3, norm="none", init_activate=True, force_tiled=True))
    assert jnp.allclose(out3t, ref3, atol=1e-4, rtol=1e-4)

    # bf16 weights: MXU operands + inter-layer activations in bf16, f32 accumulation.
    params_bf = {"weights": [w.astype(jnp.bfloat16) for w in params["weights"]],
                 "biases": params["biases"],
                 "gammas": params["gammas"], "betas": params["betas"]}
    ref_bf = mlp_forward_ref(x, params_bf, norm=norm, init_activate=init_activate)
    out_bf = jax.block_until_ready(
        mlp_forward(x, params_bf, norm=norm, init_activate=init_activate))
    assert jnp.allclose(out_bf, ref_bf, atol=8e-2, rtol=8e-2)
    out_bf_t = jax.block_until_ready(
        mlp_forward(x, params_bf, norm=norm, init_activate=init_activate, force_tiled=True))
    assert jnp.allclose(out_bf_t, ref_bf, atol=8e-2, rtol=8e-2)

    print("KERNEL_OK")
</pallas_src>

<mosaic_0001>
module attributes {stable_mosaic.version = 11 : i64} {
  func.func @_mlp_fused_kernel(%arg0: i32, %arg1: memref<8x128xf32, #tpu.memory_space<vmem>>, %arg2: memref<128x128xf32, #tpu.memory_space<vmem>>, %arg3: memref<128x128xf32, #tpu.memory_space<vmem>>, %arg4: memref<128x128xf32, #tpu.memory_space<vmem>>, %arg5: memref<1x128xf32, #tpu.memory_space<vmem>>, %arg6: memref<1x128xf32, #tpu.memory_space<vmem>>, %arg7: memref<1x128xf32, #tpu.memory_space<vmem>>, %arg8: memref<1x128xf32, #tpu.memory_space<vmem>>, %arg9: memref<1x128xf32, #tpu.memory_space<vmem>>, %arg10: memref<1x128xf32, #tpu.memory_space<vmem>>, %arg11: memref<1x128xf32, #tpu.memory_space<vmem>>, %arg12: memref<1x128xf32, #tpu.memory_space<vmem>>, %arg13: memref<1x128xf32, #tpu.memory_space<vmem>>, %arg14: memref<8x128xf32, #tpu.memory_space<vmem>>) attributes {dimension_semantics = [#tpu.dimension_semantics<parallel>], iteration_bounds = array<i64: 2>, scalar_prefetch = 0 : i64, scratch_operands = 0 : i64, tpu.core_type = #tpu.core_type<tc>, window_params = [{transform_indices = @transform_0, window_bounds = array<i64: 8, 128>}, {pipeline_mode = #tpu.pipeline_mode<synchronous>, transform_indices = @transform_1, window_bounds = array<i64: 128, 128>}, {pipeline_mode = #tpu.pipeline_mode<synchronous>, transform_indices = @transform_2, window_bounds = array<i64: 128, 128>}, {pipeline_mode = #tpu.pipeline_mode<synchronous>, transform_indices = @transform_3, window_bounds = array<i64: 128, 128>}, {pipeline_mode = #tpu.pipeline_mode<synchronous>, transform_indices = @transform_4, window_bounds = array<i64: 1, 128>}, {pipeline_mode = #tpu.pipeline_mode<synchronous>, transform_indices = @transform_5, window_bounds = array<i64: 1, 128>}, {pipeline_mode = #tpu.pipeline_mode<synchronous>, transform_indices = @transform_6, window_bounds = array<i64: 1, 128>}, {pipeline_mode = #tpu.pipeline_mode<synchronous>, transform_indices = @transform_7, window_bounds = array<i64: 1, 128>}, {pipeline_mode = #tpu.pipeline_mode<synchronous>, transform_indices = @transform_8, window_bounds = array<i64: 1, 128>}, {pipeline_mode = #tpu.pipeline_mode<synchronous>, transform_indices = @transform_9, window_bounds = array<i64: 1, 128>}, {pipeline_mode = #tpu.pipeline_mode<synchronous>, transform_indices = @transform_10, window_bounds = array<i64: 1, 128>}, {pipeline_mode = #tpu.pipeline_mode<synchronous>, transform_indices = @transform_11, window_bounds = array<i64: 1, 128>}, {pipeline_mode = #tpu.pipeline_mode<synchronous>, transform_indices = @transform_12, window_bounds = array<i64: 1, 128>}, {transform_indices = @transform_13, window_bounds = array<i64: 8, 128>}]} {
    %c0 = arith.constant 0 : index
    %c0_0 = arith.constant 0 : index
    %0 = vector.load %arg1[%c0, %c0_0] : memref<8x128xf32, #tpu.memory_space<vmem>>, vector<8x128xf32>
    %c0_1 = arith.constant 0 : index
    %c0_2 = arith.constant 0 : index
    %1 = vector.load %arg8[%c0_1, %c0_2] : memref<1x128xf32, #tpu.memory_space<vmem>>, vector<1x128xf32>
    %c0_3 = arith.constant 0 : index
    %c0_4 = arith.constant 0 : index
    %2 = vector.load %arg11[%c0_3, %c0_4] : memref<1x128xf32, #tpu.memory_space<vmem>>, vector<1x128xf32>
    %cst = arith.constant dense<0.000000e+00> : vector<8xf32>
    %3 = vector.multi_reduction <add>, %0, %cst [1] : vector<8x128xf32> to vector<8xf32>
    %4 = vector.shape_cast %3 : vector<8xf32> to vector<8x1xf32>
    %cst_5 = arith.constant 3.125000e-02 : f32
    %5 = vector.broadcast %cst_5 : f32 to vector<8x1xf32>
    %6 = arith.mulf %4, %5 : vector<8x1xf32>
    %7 = arith.mulf %0, %0 : vector<8x128xf32>
    %cst_6 = arith.constant dense<0.000000e+00> : vector<8xf32>
    %8 = vector.multi_reduction <add>, %7, %cst_6 [1] : vector<8x128xf32> to vector<8xf32>
    %9 = vector.shape_cast %8 : vector<8xf32> to vector<8x1xf32>
    %cst_7 = arith.constant 3.125000e-02 : f32
    %10 = vector.broadcast %cst_7 : f32 to vector<8x1xf32>
    %11 = arith.mulf %9, %10 : vector<8x1xf32>
    %12 = arith.mulf %6, %6 : vector<8x1xf32>
    %13 = arith.subf %11, %12 : vector<8x1xf32>
    %cst_8 = arith.constant 0.000000e+00 : f32
    %14 = vector.broadcast %cst_8 : f32 to vector<8x1xf32>
    %15 = arith.maximumf %13, %14 : vector<8x1xf32>
    %16 = vector.broadcast %6 : vector<8x1xf32> to vector<8x128xf32>
    %17 = arith.subf %0, %16 : vector<8x128xf32>
    %cst_9 = arith.constant 9.99999974E-6 : f32
    %18 = vector.broadcast %cst_9 : f32 to vector<8x1xf32>
    %19 = arith.addf %15, %18 : vector<8x1xf32>
    %20 = math.rsqrt %19 : vector<8x1xf32>
    %21 = vector.broadcast %20 : vector<8x1xf32> to vector<8x128xf32>
    %22 = arith.mulf %17, %21 : vector<8x128xf32>
    %23 = vector.broadcast %1 : vector<1x128xf32> to vector<8x128xf32>
    %24 = arith.mulf %22, %23 : vector<8x128xf32>
    %25 = vector.broadcast %2 : vector<1x128xf32> to vector<8x128xf32>
    %26 = arith.addf %24, %25 : vector<8x128xf32>
    %cst_10 = arith.constant 0.000000e+00 : f32
    %27 = vector.broadcast %cst_10 : f32 to vector<8x128xf32>
    %28 = arith.maximumf %26, %27 : vector<8x128xf32>
    %c0_11 = arith.constant 0 : index
    %c0_12 = arith.constant 0 : index
    %29 = vector.load %arg2[%c0_11, %c0_12] : memref<128x128xf32, #tpu.memory_space<vmem>>, vector<128x128xf32>
    %cst_13 = arith.constant dense<0.000000e+00> : vector<8x128xf32>
    %30 = tpu.matmul %28, %29, %cst_13 {dimension_numbers = #tpu.dot_dimension_numbers<[1], [0], [0], [1], [0, 0, 1, 1], [], []>} : vector<8x128xf32>, vector<128x128xf32>, vector<8x128xf32> -> vector<8x128xf32>
    %c0_14 = arith.constant 0 : index
    %c0_15 = arith.constant 0 : index
    %31 = vector.load %arg5[%c0_14, %c0_15] : memref<1x128xf32, #tpu.memory_space<vmem>>, vector<1x128xf32>
    %32 = vector.broadcast %31 : vector<1x128xf32> to vector<8x128xf32>
    %33 = arith.addf %30, %32 : vector<8x128xf32>
    %c0_16 = arith.constant 0 : index
    %c0_17 = arith.constant 0 : index
    %34 = vector.load %arg9[%c0_16, %c0_17] : memref<1x128xf32, #tpu.memory_space<vmem>>, vector<1x128xf32>
    %c0_18 = arith.constant 0 : index
    %c0_19 = arith.constant 0 : index
    %35 = vector.load %arg12[%c0_18, %c0_19] : memref<1x128xf32, #tpu.memory_space<vmem>>, vector<1x128xf32>
    %cst_20 = arith.constant dense<0.000000e+00> : vector<8xf32>
    %36 = vector.multi_reduction <add>, %33, %cst_20 [1] : vector<8x128xf32> to vector<8xf32>
    %37 = vector.shape_cast %36 : vector<8xf32> to vector<8x1xf32>
    %cst_21 = arith.constant 3.125000e-02 : f32
    %38 = vector.broadcast %cst_21 : f32 to vector<8x1xf32>
    %39 = arith.mulf %37, %38 : vector<8x1xf32>
    %40 = arith.mulf %33, %33 : vector<8x128xf32>
    %cst_22 = arith.constant dense<0.000000e+00> : vector<8xf32>
    %41 = vector.multi_reduction <add>, %40, %cst_22 [1] : vector<8x128xf32> to vector<8xf32>
    %42 = vector.shape_cast %41 : vector<8xf32> to vector<8x1xf32>
    %cst_23 = arith.constant 3.125000e-02 : f32
    %43 = vector.broadcast %cst_23 : f32 to vector<8x1xf32>
    %44 = arith.mulf %42, %43 : vector<8x1xf32>
    %45 = arith.mulf %39, %39 : vector<8x1xf32>
    %46 = arith.subf %44, %45 : vector<8x1xf32>
    %cst_24 = arith.constant 0.000000e+00 : f32
    %47 = vector.broadcast %cst_24 : f32 to vector<8x1xf32>
    %48 = arith.maximumf %46, %47 : vector<8x1xf32>
    %49 = vector.broadcast %39 : vector<8x1xf32> to vector<8x128xf32>
    %50 = arith.subf %33, %49 : vector<8x128xf32>
    %cst_25 = arith.constant 9.99999974E-6 : f32
    %51 = vector.broadcast %cst_25 : f32 to vector<8x1xf32>
    %52 = arith.addf %48, %51 : vector<8x1xf32>
    %53 = math.rsqrt %52 : vector<8x1xf32>
    %54 = vector.broadcast %53 : vector<8x1xf32> to vector<8x128xf32>
    %55 = arith.mulf %50, %54 : vector<8x128xf32>
    %56 = vector.broadcast %34 : vector<1x128xf32> to vector<8x128xf32>
    %57 = arith.mulf %55, %56 : vector<8x128xf32>
    %58 = vector.broadcast %35 : vector<1x128xf32> to vector<8x128xf32>
    %59 = arith.addf %57, %58 : vector<8x128xf32>
    %cst_26 = arith.constant 0.000000e+00 : f32
    %60 = vector.broadcast %cst_26 : f32 to vector<8x128xf32>
    %61 = arith.maximumf %59, %60 : vector<8x128xf32>
    %c0_27 = arith.constant 0 : index
    %c0_28 = arith.constant 0 : index
    %62 = vector.load %arg3[%c0_27, %c0_28] : memref<128x128xf32, #tpu.memory_space<vmem>>, vector<128x128xf32>
    %cst_29 = arith.constant dense<0.000000e+00> : vector<8x128xf32>
    %63 = tpu.matmul %61, %62, %cst_29 {dimension_numbers = #tpu.dot_dimension_numbers<[1], [0], [0], [1], [0, 0, 1, 1], [], []>} : vector<8x128xf32>, vector<128x128xf32>, vector<8x128xf32> -> vector<8x128xf32>
    %c0_30 = arith.constant 0 : index
    %c0_31 = arith.constant 0 : index
    %64 = vector.load %arg6[%c0_30, %c0_31] : memref<1x128xf32, #tpu.memory_space<vmem>>, vector<1x128xf32>
    %65 = vector.broadcast %64 : vector<1x128xf32> to vector<8x128xf32>
    %66 = arith.addf %63, %65 : vector<8x128xf32>
    %c0_32 = arith.constant 0 : index
    %c0_33 = arith.constant 0 : index
    %67 = vector.load %arg10[%c0_32, %c0_33] : memref<1x128xf32, #tpu.memory_space<vmem>>, vector<1x128xf32>
    %c0_34 = arith.constant 0 : index
    %c0_35 = arith.constant 0 : index
    %68 = vector.load %arg13[%c0_34, %c0_35] : memref<1x128xf32, #tpu.memory_space<vmem>>, vector<1x128xf32>
    %cst_36 = arith.constant dense<0.000000e+00> : vector<8xf32>
    %69 = vector.multi_reduction <add>, %66, %cst_36 [1] : vector<8x128xf32> to vector<8xf32>
    %70 = vector.shape_cast %69 : vector<8xf32> to vector<8x1xf32>
    %cst_37 = arith.constant 3.125000e-02 : f32
    %71 = vector.broadcast %cst_37 : f32 to vector<8x1xf32>
    %72 = arith.mulf %70, %71 : vector<8x1xf32>
    %73 = arith.mulf %66, %66 : vector<8x128xf32>
    %cst_38 = arith.constant dense<0.000000e+00> : vector<8xf32>
    %74 = vector.multi_reduction <add>, %73, %cst_38 [1] : vector<8x128xf32> to vector<8xf32>
    %75 = vector.shape_cast %74 : vector<8xf32> to vector<8x1xf32>
    %cst_39 = arith.constant 3.125000e-02 : f32
    %76 = vector.broadcast %cst_39 : f32 to vector<8x1xf32>
    %77 = arith.mulf %75, %76 : vector<8x1xf32>
    %78 = arith.mulf %72, %72 : vector<8x1xf32>
    %79 = arith.subf %77, %78 : vector<8x1xf32>
    %cst_40 = arith.constant 0.000000e+00 : f32
    %80 = vector.broadcast %cst_40 : f32 to vector<8x1xf32>
    %81 = arith.maximumf %79, %80 : vector<8x1xf32>
    %82 = vector.broadcast %72 : vector<8x1xf32> to vector<8x128xf32>
    %83 = arith.subf %66, %82 : vector<8x128xf32>
    %cst_41 = arith.constant 9.99999974E-6 : f32
    %84 = vector.broadcast %cst_41 : f32 to vector<8x1xf32>
    %85 = arith.addf %81, %84 : vector<8x1xf32>
    %86 = math.rsqrt %85 : vector<8x1xf32>
    %87 = vector.broadcast %86 : vector<8x1xf32> to vector<8x128xf32>
    %88 = arith.mulf %83, %87 : vector<8x128xf32>
    %89 = vector.broadcast %67 : vector<1x128xf32> to vector<8x128xf32>
    %90 = arith.mulf %88, %89 : vector<8x128xf32>
    %91 = vector.broadcast %68 : vector<1x128xf32> to vector<8x128xf32>
    %92 = arith.addf %90, %91 : vector<8x128xf32>
    %cst_42 = arith.constant 0.000000e+00 : f32
    %93 = vector.broadcast %cst_42 : f32 to vector<8x128xf32>
    %94 = arith.maximumf %92, %93 : vector<8x128xf32>
    %c0_43 = arith.constant 0 : index
    %c0_44 = arith.constant 0 : index
    %95 = vector.load %arg4[%c0_43, %c0_44] : memref<128x128xf32, #tpu.memory_space<vmem>>, vector<128x128xf32>
    %cst_45 = arith.constant dense<0.000000e+00> : vector<8x128xf32>
    %96 = tpu.matmul %94, %95, %cst_45 {dimension_numbers = #tpu.dot_dimension_numbers<[1], [0], [0], [1], [0, 0, 1, 1], [], []>} : vector<8x128xf32>, vector<128x128xf32>, vector<8x128xf32> -> vector<8x128xf32>
    %c0_46 = arith.constant 0 : index
    %c0_47 = arith.constant 0 : index
    %97 = vector.load %arg7[%c0_46, %c0_47] : memref<1x128xf32, #tpu.memory_space<vmem>>, vector<1x128xf32>
    %98 = vector.broadcast %97 : vector<1x128xf32> to vector<8x128xf32>
    %99 = arith.addf %96, %98 : vector<8x128xf32>
    %c0_48 = arith.constant 0 : index
    %c0_49 = arith.constant 0 : index
    %100 = vector.load %arg14[%c0_48, %c0_49] : memref<8x128xf32, #tpu.memory_space<vmem>>, vector<8x128xf32>
    tpu.vector_store %arg14[%c0_48, %c0_49], %99 {strides = array<i32>} : memref<8x128xf32, #tpu.memory_space<vmem>>, vector<8x128xf32>,
    return
  }
  func.func @transform_0(%arg0: i32) -> (i32, i32) {
    %c0_i32 = arith.constant 0 : i32
    %c0_i32_0 = arith.constant 0 : i32
    return %arg0, %c0_i32 : i32, i32
  }
  func.func @transform_1(%arg0: i32) -> (i32, i32) {
    %c0_i32 = arith.constant 0 : i32
    %c0_i32_0 = arith.constant 0 : i32
    %c0_i32_1 = arith.constant 0 : i32
    return %c0_i32, %c0_i32_0 : i32, i32
  }
  func.func @transform_2(%arg0: i32) -> (i32, i32) {
    %c0_i32 = arith.constant 0 : i32
    %c0_i32_0 = arith.constant 0 : i32
    %c0_i32_1 = arith.constant 0 : i32
    return %c0_i32, %c0_i32_0 : i32, i32
  }
  func.func @transform_3(%arg0: i32) -> (i32, i32) {
    %c0_i32 = arith.constant 0 : i32
    %c0_i32_0 = arith.constant 0 : i32
    %c0_i32_1 = arith.constant 0 : i32
    return %c0_i32, %c0_i32_0 : i32, i32
  }
  func.func @transform_4(%arg0: i32) -> (i32, i32) {
    %c0_i32 = arith.constant 0 : i32
    %c0_i32_0 = arith.constant 0 : i32
    %c0_i32_1 = arith.constant 0 : i32
    return %c0_i32, %c0_i32_0 : i32, i32
  }
  func.func @transform_5(%arg0: i32) -> (i32, i32) {
    %c0_i32 = arith.constant 0 : i32
    %c0_i32_0 = arith.constant 0 : i32
    %c0_i32_1 = arith.constant 0 : i32
    return %c0_i32, %c0_i32_0 : i32, i32
  }
  func.func @transform_6(%arg0: i32) -> (i32, i32) {
    %c0_i32 = arith.constant 0 : i32
    %c0_i32_0 = arith.constant 0 : i32
    %c0_i32_1 = arith.constant 0 : i32
    return %c0_i32, %c0_i32_0 : i32, i32
  }
  func.func @transform_7(%arg0: i32) -> (i32, i32) {
    %c0_i32 = arith.constant 0 : i32
    %c0_i32_0 = arith.constant 0 : i32
    %c0_i32_1 = arith.constant 0 : i32
    return %c0_i32, %c0_i32_0 : i32, i32
  }
  func.func @transform_8(%arg0: i32) -> (i32, i32) {
    %c0_i32 = arith.constant 0 : i32
    %c0_i32_0 = arith.constant 0 : i32
    %c0_i32_1 = arith.constant 0 : i32
    return %c0_i32, %c0_i32_0 : i32, i32
  }
  func.func @transform_9(%arg0: i32) -> (i32, i32) {
    %c0_i32 = arith.constant 0 : i32
    %c0_i32_0 = arith.constant 0 : i32
    %c0_i32_1 = arith.constant 0 : i32
    return %c0_i32, %c0_i32_0 : i32, i32
  }
  func.func @transform_10(%arg0: i32) -> (i32, i32) {
    %c0_i32 = arith.constant 0 : i32
    %c0_i32_0 = arith.constant 0 : i32
    %c0_i32_1 = arith.constant 0 : i32
    return %c0_i32, %c0_i32_0 : i32, i32
  }
  func.func @transform_11(%arg0: i32) -> (i32, i32) {
    %c0_i32 = arith.constant 0 : i32
    %c0_i32_0 = arith.constant 0 : i32
    %c0_i32_1 = arith.constant 0 : i32
    return %c0_i32, %c0_i32_0 : i32, i32
  }
  func.func @transform_12(%arg0: i32) -> (i32, i32) {
    %c0_i32 = arith.constant 0 : i32
    %c0_i32_0 = arith.constant 0 : i32
    %c0_i32_1 = arith.constant 0 : i32
    return %c0_i32, %c0_i32_0 : i32, i32
  }
  func.func @transform_13(%arg0: i32) -> (i32, i32) {
    %c0_i32 = arith.constant 0 : i32
    %c0_i32_0 = arith.constant 0 : i32
    return %arg0, %c0_i32 : i32, i32
  }
}

</mosaic_0001>

<llo_original>
// kernel: tpu_custom_call.1
$region0: #{tpu_custom_call.1}
  #allocation0 [shape = 'u32[]', space=smem, size = 0x4, offset = 0x4, fixed_abs, tag = 'smem constant byte address 0x4 - core index']
  #allocation1 [shape = 'u32[72,128]{1,0:T(1,128)}', space=vmem, size = 0x9000, scoped, tag = 'internal scratch']
  %s0 = inlined_call_operand.hbm [shape: f32[16,128], index: 0, kind: input, shape index: {}]
  %s1 = inlined_call_operand.hbm [shape: f32[128,128], index: 1, kind: input, shape index: {}]
  %s2 = inlined_call_operand.hbm [shape: f32[128,128], index: 2, kind: input, shape index: {}]
  %s3 = inlined_call_operand.hbm [shape: f32[128,128], index: 3, kind: input, shape index: {}]
  %s4 = inlined_call_operand.vmem [shape: f32[1,128], index: 4, kind: input, shape index: {}]
  %s5 = inlined_call_operand.vmem [shape: f32[1,128], index: 5, kind: input, shape index: {}]
  %s6 = inlined_call_operand.vmem [shape: f32[1,128], index: 6, kind: input, shape index: {}]
  %s7 = inlined_call_operand.vmem [shape: f32[1,128], index: 7, kind: input, shape index: {}]
  %s8 = inlined_call_operand.vmem [shape: f32[1,128], index: 8, kind: input, shape index: {}]
  %s9 = inlined_call_operand.vmem [shape: f32[1,128], index: 9, kind: input, shape index: {}]
  %s10 = inlined_call_operand.vmem [shape: f32[1,128], index: 10, kind: input, shape index: {}]
  %s11 = inlined_call_operand.vmem [shape: f32[1,128], index: 11, kind: input, shape index: {}]
  %s12 = inlined_call_operand.vmem [shape: f32[1,128], index: 12, kind: input, shape index: {}]
  %s13 = inlined_call_operand.hbm [shape: f32[16,128], index: 13, kind: output, shape index: {}]
  %s14 = sld [smem:[#allocation0]]
  $region101: #{tpu_custom_call.1} parent=0
    _
  %s16 = ssub.s32 1, %s14
  %s17 = scalar_select 0, %s16, %s14
  $region1: #{tpu_custom_call.1} parent=0
    #allocation2 [shape = 'u8[8192]{0}', space=vmem, size = 0x2000, scoped, tag = 'input window, operand 0']
    #allocation3 [shape = 's32[2]{0}', space=sflag, size = 0x8, scoped, tag = 'scoped memory for tpu_custom_call.1']
    #allocation4 [shape = 's32[2]{0}', space=sflag, size = 0x8, scoped, tag = 'scoped memory for tpu_custom_call.1']
    #allocation5 [shape = 'u8[65536]{0}', space=vmem, size = 0x10000, scoped, tag = 'input window, operand 1, single buffered']
    #allocation6 [shape = 's32[1]{0}', space=sflag, size = 0x4, scoped, tag = 'scoped memory for tpu_custom_call.1']
    #allocation7 [shape = 'u8[65536]{0}', space=vmem, size = 0x10000, scoped, tag = 'input window, operand 2, single buffered']
    #allocation8 [shape = 'u8[65536]{0}', space=vmem, size = 0x10000, scoped, tag = 'input window, operand 3, single buffered']
    #allocation9 [shape = 's32[1]{0}', space=sflag, size = 0x4, scoped, tag = 'scoped memory for tpu_custom_call.1']
    #allocation10 [shape = 'u8[8192]{0}', space=vmem, size = 0x2000, scoped, tag = 'output window, operand 0']
    %18 = vsyncpa [#allocation3], 0
    %s19 = scalar_lea.sflag [#allocation3], 1
    %20 = vsyncpa %s19, 0
    %21 = vsyncpa [#allocation6], 0
    %22 = vsyncpa [#allocation9], 0
    %23 = vsyncpa [#allocation4], 0
    %s24 = scalar_lea.sflag [#allocation4], 1
    %25 = vsyncpa %s24, 0
    loop: start=0, step=1, limit=4
    $region2: #{tpu_custom_call.1} parent=1 // loop_pre_header
      _
    $region3: #{tpu_custom_call.1} parent=1 // loop_header
      %s27 = sphi 0, %s31
      %p28 = scmp.ge.s32.totalorder %s27, 4
      %s37 = sphi 0, %s39
      %s40 = sphi 0, %s37
      %s41 = sphi 0, %s40
      %s57 = sphi 0, %s41
      %s61 = sphi 0, %s61
      %s63 = sphi 0, %s61
      %s64 = sphi 0, %s63
      %s78 = sphi 0, %s64
      %s82 = sphi 0, %s82
      %s84 = sphi 0, %s82
      %s85 = sphi 0, %s84
      %s99 = sphi 0, %s85
      %s103 = sphi 0, %s103
      %s105 = sphi 0, %s103
      %s106 = sphi 0, %s105
      %s120 = sphi 0, %s106
      %s124 = sphi 0, %s124
      %s126 = sphi 0, %s124
      %s127 = sphi 0, %s126
      %s141 = sphi 0, %s127
      %s145 = sphi 0, %s145
      %s147 = sphi 0, %s145
      %s148 = sphi 0, %s147
      %s162 = sphi 0, %s148
      %s166 = sphi 0, %s166
      %s168 = sphi 0, %s166
      %s169 = sphi 0, %s168
      %s183 = sphi 0, %s169
      %s187 = sphi 0, %s187
      %s189 = sphi 0, %s187
      %s190 = sphi 0, %s189
      %s204 = sphi 0, %s190
      %s208 = sphi 0, %s208
      %s210 = sphi 0, %s208
      %s211 = sphi 0, %s210
      %s225 = sphi 0, %s211
      %s229 = sphi 0, %s229
      %s231 = sphi 0, %s229
      %s232 = sphi 0, %s231
      %s246 = sphi 0, %s232
      %s250 = sphi 0, %s250
      %s252 = sphi 0, %s250
      %s253 = sphi 0, %s252
      %s267 = sphi 0, %s253
      %s271 = sphi 0, %s271
      %s273 = sphi 0, %s271
      %s274 = sphi 0, %s273
      %s288 = sphi 0, %s274
      %s292 = sphi 0, %s292
      %s294 = sphi 0, %s292
      %s295 = sphi 0, %s294
      %s309 = sphi 0, %s295
      %s315 = sphi 0, %s317
      %s318 = sphi 0, %s315
      %s319 = sphi 0, %s318
      %s335 = sphi 0, %s319
    $region4: #{tpu_custom_call.1} parent=1 // loop_header_branch
      %30 = sbr.rel (%p28) target = $region8
    $region5: #{tpu_custom_call.1} parent=1 // loop_body
      %s32 = ssub.s32 %s27, 1
      %s33 = ssub.s32 %s27, 2
      %s34 = sadd.s32 %s27, 1
      %s35 = ssub.s32 %s27, %s34
      %p36 = scmp.eq.s32.totalorder %s35, 0
      %s38 = sadd.s32 %s37, 1
      %s39 = scalar_select %p36, %s37, %s38
      %p42 = pneg %p36
      %p43 = scmp.eq.s32.totalorder %s27, 1
      %p44 = por %p42, %p43
      %p45 = scmp.ne.s32.totalorder %s37, %s40
      %p46 = scmp.eq.s32.totalorder %s27, 0
      %p47 = por %p45, %p46
      %p48 = scmp.ne.s32.totalorder %s37, %s40
      %p49 = scmp.eq.s32.totalorder %s32, 1
      %p50 = por %p48, %p49
      %p51 = scmp.ne.s32.totalorder %s40, %s41
      %p52 = scmp.eq.s32.totalorder %s32, 0
      %p53 = por %p51, %p52
      %p54 = scmp.ne.s32.totalorder %s40, %s41
      %p55 = scmp.eq.s32.totalorder %s33, 1
      %p56 = por %p54, %p55
      %p58 = scmp.ne.s32.totalorder %s41, %s57
      %p59 = scmp.eq.s32.totalorder %s33, 0
      %p60 = por %p58, %p59
      %s62 = sadd.s32 %s61, 1
      %p65 = scmp.eq.s32.totalorder %s27, 1
      %p66 = scmp.ne.s32.totalorder %s61, %s63
      %p67 = scmp.eq.s32.totalorder %s27, 0
      %p68 = por %p66, %p67
      %p69 = scmp.ne.s32.totalorder %s61, %s63
      %p70 = scmp.eq.s32.totalorder %s32, 1
      %p71 = por %p69, %p70
      %p72 = scmp.ne.s32.totalorder %s63, %s64
      %p73 = scmp.eq.s32.totalorder %s32, 0
      %p74 = por %p72, %p73
      %p75 = scmp.ne.s32.totalorder %s63, %s64
      %p76 = scmp.eq.s32.totalorder %s33, 1
      %p77 = por %p75, %p76
      %p79 = scmp.ne.s32.totalorder %s64, %s78
      %p80 = scmp.eq.s32.totalorder %s33, 0
      %p81 = por %p79, %p80
      %s83 = sadd.s32 %s82, 1
      %p86 = scmp.eq.s32.totalorder %s27, 1
      %p87 = scmp.ne.s32.totalorder %s82, %s84
      %p88 = scmp.eq.s32.totalorder %s27, 0
      %p89 = por %p87, %p88
      %p90 = scmp.ne.s32.totalorder %s82, %s84
      %p91 = scmp.eq.s32.totalorder %s32, 1
      %p92 = por %p90, %p91
      %p93 = scmp.ne.s32.totalorder %s84, %s85
      %p94 = scmp.eq.s32.totalorder %s32, 0
      %p95 = por %p93, %p94
      %p96 = scmp.ne.s32.totalorder %s84, %s85
      %p97 = scmp.eq.s32.totalorder %s33, 1
      %p98 = por %p96, %p97
      %p100 = scmp.ne.s32.totalorder %s85, %s99
      %p101 = scmp.eq.s32.totalorder %s33, 0
      %p102 = por %p100, %p101
      %s104 = sadd.s32 %s103, 1
      %p107 = scmp.eq.s32.totalorder %s27, 1
      %p108 = scmp.ne.s32.totalorder %s103, %s105
      %p109 = scmp.eq.s32.totalorder %s27, 0
      %p110 = por %p108, %p109
      %p111 = scmp.ne.s32.totalorder %s103, %s105
      %p112 = scmp.eq.s32.totalorder %s32, 1
      %p113 = por %p111, %p112
      %p114 = scmp.ne.s32.totalorder %s105, %s106
      %p115 = scmp.eq.s32.totalorder %s32, 0
      %p116 = por %p114, %p115
      %p117 = scmp.ne.s32.totalorder %s105, %s106
      %p118 = scmp.eq.s32.totalorder %s33, 1
      %p119 = por %p117, %p118
      %p121 = scmp.ne.s32.totalorder %s106, %s120
      %p122 = scmp.eq.s32.totalorder %s33, 0
      %p123 = por %p121, %p122
      %s125 = sadd.s32 %s124, 1
      %p128 = scmp.eq.s32.totalorder %s27, 1
      %p129 = scmp.ne.s32.totalorder %s124, %s126
      %p130 = scmp.eq.s32.totalorder %s27, 0
      %p131 = por %p129, %p130
      %p132 = scmp.ne.s32.totalorder %s124, %s126
      %p133 = scmp.eq.s32.totalorder %s32, 1
      %p134 = por %p132, %p133
      %p135 = scmp.ne.s32.totalorder %s126, %s127
      %p136 = scmp.eq.s32.totalorder %s32, 0
      %p137 = por %p135, %p136
      %p138 = scmp.ne.s32.totalorder %s126, %s127
      %p139 = scmp.eq.s32.totalorder %s33, 1
      %p140 = por %p138, %p139
      %p142 = scmp.ne.s32.totalorder %s127, %s141
      %p143 = scmp.eq.s32.totalorder %s33, 0
      %p144 = por %p142, %p143
      %s146 = sadd.s32 %s145, 1
      %p149 = scmp.eq.s32.totalorder %s27, 1
      %p150 = scmp.ne.s32.totalorder %s145, %s147
      %p151 = scmp.eq.s32.totalorder %s27, 0
      %p152 = por %p150, %p151
      %p153 = scmp.ne.s32.totalorder %s145, %s147
      %p154 = scmp.eq.s32.totalorder %s32, 1
      %p155 = por %p153, %p154
      %p156 = scmp.ne.s32.totalorder %s147, %s148
      %p157 = scmp.eq.s32.totalorder %s32, 0
      %p158 = por %p156, %p157
      %p159 = scmp.ne.s32.totalorder %s147, %s148
      %p160 = scmp.eq.s32.totalorder %s33, 1
      %p161 = por %p159, %p160
      %p163 = scmp.ne.s32.totalorder %s148, %s162
      %p164 = scmp.eq.s32.totalorder %s33, 0
      %p165 = por %p163, %p164
      %s167 = sadd.s32 %s166, 1
      %p170 = scmp.eq.s32.totalorder %s27, 1
      %p171 = scmp.ne.s32.totalorder %s166, %s168
      %p172 = scmp.eq.s32.totalorder %s27, 0
      %p173 = por %p171, %p172
      %p174 = scmp.ne.s32.totalorder %s166, %s168
      %p175 = scmp.eq.s32.totalorder %s32, 1
      %p176 = por %p174, %p175
      %p177 = scmp.ne.s32.totalorder %s168, %s169
      %p178 = scmp.eq.s32.totalorder %s32, 0
      %p179 = por %p177, %p178
      %p180 = scmp.ne.s32.totalorder %s168, %s169
      %p181 = scmp.eq.s32.totalorder %s33, 1
      %p182 = por %p180, %p181
      %p184 = scmp.ne.s32.totalorder %s169, %s183
      %p185 = scmp.eq.s32.totalorder %s33, 0
      %p186 = por %p184, %p185
      %s188 = sadd.s32 %s187, 1
      %p191 = scmp.eq.s32.totalorder %s27, 1
      %p192 = scmp.ne.s32.totalorder %s187, %s189
      %p193 = scmp.eq.s32.totalorder %s27, 0
      %p194 = por %p192, %p193
      %p195 = scmp.ne.s32.totalorder %s187, %s189
      %p196 = scmp.eq.s32.totalorder %s32, 1
      %p197 = por %p195, %p196
      %p198 = scmp.ne.s32.totalorder %s189, %s190
      %p199 = scmp.eq.s32.totalorder %s32, 0
      %p200 = por %p198, %p199
      %p201 = scmp.ne.s32.totalorder %s189, %s190
      %p202 = scmp.eq.s32.totalorder %s33, 1
      %p203 = por %p201, %p202
      %p205 = scmp.ne.s32.totalorder %s190, %s204
      %p206 = scmp.eq.s32.totalorder %s33, 0
      %p207 = por %p205, %p206
      %s209 = sadd.s32 %s208, 1
      %p212 = scmp.eq.s32.totalorder %s27, 1
      %p213 = scmp.ne.s32.totalorder %s208, %s210
      %p214 = scmp.eq.s32.totalorder %s27, 0
      %p215 = por %p213, %p214
      %p216 = scmp.ne.s32.totalorder %s208, %s210
      %p217 = scmp.eq.s32.totalorder %s32, 1
      %p218 = por %p216, %p217
      %p219 = scmp.ne.s32.totalorder %s210, %s211
      %p220 = scmp.eq.s32.totalorder %s32, 0
      %p221 = por %p219, %p220
      %p222 = scmp.ne.s32.totalorder %s210, %s211
      %p223 = scmp.eq.s32.totalorder %s33, 1
      %p224 = por %p222, %p223
      %p226 = scmp.ne.s32.totalorder %s211, %s225
      %p227 = scmp.eq.s32.totalorder %s33, 0
      %p228 = por %p226, %p227
      %s230 = sadd.s32 %s229, 1
      %p233 = scmp.eq.s32.totalorder %s27, 1
      %p234 = scmp.ne.s32.totalorder %s229, %s231
      %p235 = scmp.eq.s32.totalorder %s27, 0
      %p236 = por %p234, %p235
      %p237 = scmp.ne.s32.totalorder %s229, %s231
      %p238 = scmp.eq.s32.totalorder %s32, 1
      %p239 = por %p237, %p238
      %p240 = scmp.ne.s32.totalorder %s231, %s232
      %p241 = scmp.eq.s32.totalorder %s32, 0
      %p242 = por %p240, %p241
      %p243 = scmp.ne.s32.totalorder %s231, %s232
      %p244 = scmp.eq.s32.totalorder %s33, 1
      %p245 = por %p243, %p244
      %p247 = scmp.ne.s32.totalorder %s232, %s246
      %p248 = scmp.eq.s32.totalorder %s33, 0
      %p249 = por %p247, %p248
      %s251 = sadd.s32 %s250, 1
      %p254 = scmp.eq.s32.totalorder %s27, 1
      %p255 = scmp.ne.s32.totalorder %s250, %s252
      %p256 = scmp.eq.s32.totalorder %s27, 0
      %p257 = por %p255, %p256
      %p258 = scmp.ne.s32.totalorder %s250, %s252
      %p259 = scmp.eq.s32.totalorder %s32, 1
      %p260 = por %p258, %p259
      %p261 = scmp.ne.s32.totalorder %s252, %s253
      %p262 = scmp.eq.s32.totalorder %s32, 0
      %p263 = por %p261, %p262
      %p264 = scmp.ne.s32.totalorder %s252, %s253
      %p265 = scmp.eq.s32.totalorder %s33, 1
      %p266 = por %p264, %p265
      %p268 = scmp.ne.s32.totalorder %s253, %s267
      %p269 = scmp.eq.s32.totalorder %s33, 0
      %p270 = por %p268, %p269
      %s272 = sadd.s32 %s271, 1
      %p275 = scmp.eq.s32.totalorder %s27, 1
      %p276 = scmp.ne.s32.totalorder %s271, %s273
      %p277 = scmp.eq.s32.totalorder %s27, 0
      %p278 = por %p276, %p277
      %p279 = scmp.ne.s32.totalorder %s271, %s273
      %p280 = scmp.eq.s32.totalorder %s32, 1
      %p281 = por %p279, %p280
      %p282 = scmp.ne.s32.totalorder %s273, %s274
      %p283 = scmp.eq.s32.totalorder %s32, 0
      %p284 = por %p282, %p283
      %p285 = scmp.ne.s32.totalorder %s273, %s274
      %p286 = scmp.eq.s32.totalorder %s33, 1
      %p287 = por %p285, %p286
      %p289 = scmp.ne.s32.totalorder %s274, %s288
      %p290 = scmp.eq.s32.totalorder %s33, 0
      %p291 = por %p289, %p290
      %s293 = sadd.s32 %s292, 1
      %p296 = scmp.eq.s32.totalorder %s27, 1
      %p297 = scmp.ne.s32.totalorder %s292, %s294
      %p298 = scmp.eq.s32.totalorder %s27, 0
      %p299 = por %p297, %p298
      %p300 = scmp.ne.s32.totalorder %s292, %s294
      %p301 = scmp.eq.s32.totalorder %s32, 1
      %p302 = por %p300, %p301
      %p303 = scmp.ne.s32.totalorder %s294, %s295
      %p304 = scmp.eq.s32.totalorder %s32, 0
      %p305 = por %p303, %p304
      %p306 = scmp.ne.s32.totalorder %s294, %s295
      %p307 = scmp.eq.s32.totalorder %s33, 1
      %p308 = por %p306, %p307
      %p310 = scmp.ne.s32.totalorder %s295, %s309
      %p311 = scmp.eq.s32.totalorder %s33, 0
      %p312 = por %p310, %p311
      %s313 = ssub.s32 %s27, %s34
      %p314 = scmp.eq.s32.totalorder %s313, 0
      %s316 = sadd.s32 %s315, 1
      %s317 = scalar_select %p314, %s315, %s316
      %p320 = pneg %p314
      %p321 = scmp.eq.s32.totalorder %s27, 1
      %p322 = por %p320, %p321
      %p323 = scmp.ne.s32.totalorder %s315, %s318
      %p324 = scmp.eq.s32.totalorder %s27, 0
      %p325 = por %p323, %p324
      %p326 = scmp.ne.s32.totalorder %s315, %s318
      %p327 = scmp.eq.s32.totalorder %s32, 1
      %p328 = por %p326, %p327
      %p329 = scmp.ne.s32.totalorder %s318, %s319
      %p330 = scmp.eq.s32.totalorder %s32, 0
      %p331 = por %p329, %p330
      %p332 = scmp.ne.s32.totalorder %s318, %s319
      %p333 = scmp.eq.s32.totalorder %s33, 1
      %p334 = por %p332, %p333
      %p336 = scmp.ne.s32.totalorder %s319, %s335
      %p337 = scmp.eq.s32.totalorder %s33, 0
      %p338 = por %p336, %p337
      %p339 = scmp.le.s32.totalorder 1, %s27
      %p340 = scmp.lt.s32.totalorder %s27, 3
      %p341 = pnand %p339, %p340
      %p342 = pneg %p341
      // Predicated region
      $region9: #{tpu_custom_call.1} parent=5 // pred_check
        _
      $region10: #{tpu_custom_call.1} parent=5 // pred_check_branch
        %344 = sbr.rel (%p341) target = $region12
      $region11: #{tpu_custom_call.1} parent=5 // pred_region
        %s345 = ssub.s32 %s27, 1
        // Predicated region
        $region13: #{tpu_custom_call.1} parent=11 // pred_check
          %p346 = pneg %p74
        $region14: #{tpu_custom_call.1} parent=11 // pred_check_branch
          %348 = sbr.rel (%p346) target = $region16
        $region15: #{tpu_custom_call.1} parent=11 // pred_region
          %350 = vsyncadd [#allocation6], 0
          %s351 = sshll.u32 %s1, 4
          %s352 = int_to_ptr.hbm [resolvable:$true] %s351
          %s353 = sshll.u32 [#allocation5], 4
          %s354 = int_to_ptr.vmem [resolvable:$true] %s353
          %359 = dma.hbm_to_vmem [thread:$0]  %s352, 2048, %s354, [#allocation6], 128, 128, 8
        $region16: #{tpu_custom_call.1} parent=11 // pred_fallthru
          _
        // Predicated region
        $region17: #{tpu_custom_call.1} parent=11 // pred_check
          %p360 = pneg %p95
        $region18: #{tpu_custom_call.1} parent=11 // pred_check_branch
          %362 = sbr.rel (%p360) target = $region20
        $region19: #{tpu_custom_call.1} parent=11 // pred_region
          %364 = vsyncadd [#allocation6], 0
          %s365 = sshll.u32 %s2, 4
          %s366 = int_to_ptr.hbm [resolvable:$true] %s365
          %s367 = sshll.u32 [#allocation7], 4
          %s368 = int_to_ptr.vmem [resolvable:$true] %s367
          %373 = dma.hbm_to_vmem [thread:$0]  %s366, 2048, %s368, [#allocation6], 128, 128, 8
        $region20: #{tpu_custom_call.1} parent=11 // pred_fallthru
          _
        // Predicated region
        $region21: #{tpu_custom_call.1} parent=11 // pred_check
          %p374 = pneg %p116
        $region22: #{tpu_custom_call.1} parent=11 // pred_check_branch
          %376 = sbr.rel (%p374) target = $region24
        $region23: #{tpu_custom_call.1} parent=11 // pred_region
          %378 = vsyncadd [#allocation9], 0
          %s379 = sshll.u32 %s3, 4
          %s380 = int_to_ptr.hbm [resolvable:$true] %s379
          %s381 = sshll.u32 [#allocation8], 4
          %s382 = int_to_ptr.vmem [resolvable:$true] %s381
          %387 = dma.hbm_to_vmem [thread:$0]  %s380, 2048, %s382, [#allocation9], 128, 128, 8
        $region24: #{tpu_custom_call.1} parent=11 // pred_fallthru
          _
        // Predicated region
        $region25: #{tpu_custom_call.1} parent=11 // pred_check
          %p388 = pneg %p137
        $region26: #{tpu_custom_call.1} parent=11 // pred_check_branch
          %390 = sbr.rel (%p388) target = $region28
        $region27: #{tpu_custom_call.1} parent=11 // pred_region
          _
        $region28: #{tpu_custom_call.1} parent=11 // pred_fallthru
          _
        // Predicated region
        $region29: #{tpu_custom_call.1} parent=11 // pred_check
          %p391 = pneg %p158
        $region30: #{tpu_custom_call.1} parent=11 // pred_check_branch
          %393 = sbr.rel (%p391) target = $region32
        $region31: #{tpu_custom_call.1} parent=11 // pred_region
          _
        $region32: #{tpu_custom_call.1} parent=11 // pred_fallthru
          _
        // Predicated region
        $region33: #{tpu_custom_call.1} parent=11 // pred_check
          %p394 = pneg %p179
        $region34: #{tpu_custom_call.1} parent=11 // pred_check_branch
          %396 = sbr.rel (%p394) target = $region36
        $region35: #{tpu_custom_call.1} parent=11 // pred_region
          _
        $region36: #{tpu_custom_call.1} parent=11 // pred_fallthru
          _
        // Predicated region
        $region37: #{tpu_custom_call.1} parent=11 // pred_check
          %p397 = pneg %p200
        $region38: #{tpu_custom_call.1} parent=11 // pred_check_branch
          %399 = sbr.rel (%p397) target = $region40
        $region39: #{tpu_custom_call.1} parent=11 // pred_region
          _
        $region40: #{tpu_custom_call.1} parent=11 // pred_fallthru
          _
        // Predicated region
        $region41: #{tpu_custom_call.1} parent=11 // pred_check
          %p400 = pneg %p221
        $region42: #{tpu_custom_call.1} parent=11 // pred_check_branch
          %402 = sbr.rel (%p400) target = $region44
        $region43: #{tpu_custom_call.1} parent=11 // pred_region
          _
        $region44: #{tpu_custom_call.1} parent=11 // pred_fallthru
          _
        // Predicated region
        $region45: #{tpu_custom_call.1} parent=11 // pred_check
          %p403 = pneg %p242
        $region46: #{tpu_custom_call.1} parent=11 // pred_check_branch
          %405 = sbr.rel (%p403) target = $region48
        $region47: #{tpu_custom_call.1} parent=11 // pred_region
          _
        $region48: #{tpu_custom_call.1} parent=11 // pred_fallthru
          _
        // Predicated region
        $region49: #{tpu_custom_call.1} parent=11 // pred_check
          %p406 = pneg %p263
        $region50: #{tpu_custom_call.1} parent=11 // pred_check_branch
          %408 = sbr.rel (%p406) target = $region52
        $region51: #{tpu_custom_call.1} parent=11 // pred_region
          _
        $region52: #{tpu_custom_call.1} parent=11 // pred_fallthru
          _
        // Predicated region
        $region53: #{tpu_custom_call.1} parent=11 // pred_check
          %p409 = pneg %p284
        $region54: #{tpu_custom_call.1} parent=11 // pred_check_branch
          %411 = sbr.rel (%p409) target = $region56
        $region55: #{tpu_custom_call.1} parent=11 // pred_region
          _
        $region56: #{tpu_custom_call.1} parent=11 // pred_fallthru
          _
        // Predicated region
        $region57: #{tpu_custom_call.1} parent=11 // pred_check
          %p412 = pneg %p305
        $region58: #{tpu_custom_call.1} parent=11 // pred_check_branch
          %414 = sbr.rel (%p412) target = $region60
        $region59: #{tpu_custom_call.1} parent=11 // pred_region
          _
        $region60: #{tpu_custom_call.1} parent=11 // pred_fallthru
          _
      $region12: #{tpu_custom_call.1} parent=5 // pred_fallthru
        _
      %p415 = scmp.lt.s32.totalorder %s27, 2
      // Predicated region
      $region61: #{tpu_custom_call.1} parent=5 // pred_check
        %p416 = pneg %p415
      $region62: #{tpu_custom_call.1} parent=5 // pred_check_branch
        %418 = sbr.rel (%p416) target = $region64
      $region63: #{tpu_custom_call.1} parent=5 // pred_region
        // Predicated region
        $region65: #{tpu_custom_call.1} parent=63 // pred_check
          %p419 = pneg %p47
        $region66: #{tpu_custom_call.1} parent=63 // pred_check_branch
          %421 = sbr.rel (%p419) target = $region68
        $region67: #{tpu_custom_call.1} parent=63 // pred_region
          %s422 = sand.u32 %s37, 1
          %s423 = scalar_lea.sflag [#allocation3], %s422
          %s424 = sand.u32 %s37, 1
          %s425 = smul.addr %s424, 8
          %s426 = scalar_lea.vmem [#allocation2], %s425
          %428 = vsyncadd %s423, 0
          %s429 = smul.addr %s27, 8
          %s430 = scalar_lea.hbm %s0, %s429
          %s432 = sshll.u32 %s430, 4
          %s433 = int_to_ptr.hbm [resolvable:$true] %s432
          %s434 = sshll.u32 %s426, 4
          %s435 = int_to_ptr.vmem [resolvable:$true] %s434
          %437 = dma.hbm_to_vmem [thread:$0]  %s433, 128, %s435, %s423
        $region68: #{tpu_custom_call.1} parent=63 // pred_fallthru
          _
      $region64: #{tpu_custom_call.1} parent=5 // pred_fallthru
        _
      %p438 = scmp.le.s32.totalorder 1, %s27
      %p439 = scmp.lt.s32.totalorder %s27, 3
      %p440 = pnand %p438, %p439
      %p441 = pneg %p440
      // Predicated region
      $region69: #{tpu_custom_call.1} parent=5 // pred_check
        _
      $region70: #{tpu_custom_call.1} parent=5 // pred_check_branch
        %443 = sbr.rel (%p440) target = $region72
      $region71: #{tpu_custom_call.1} parent=5 // pred_region
        %s444 = ssub.s32 %s27, 1
        %s445 = sand.u32 %s40, 1
        %s446 = scalar_lea.sflag [#allocation3], %s445
        %s447 = sand.u32 %s40, 1
        %s448 = smul.addr %s447, 8
        %s449 = scalar_lea.vmem [#allocation2], %s448
        // Predicated region
        $region73: #{tpu_custom_call.1} parent=71 // pred_check
          %p450 = pneg %p53
        $region74: #{tpu_custom_call.1} parent=71 // pred_check_branch
          %452 = sbr.rel (%p450) target = $region76
        $region75: #{tpu_custom_call.1} parent=71 // pred_region
          %454 = dma.done %s446, 128
        $region76: #{tpu_custom_call.1} parent=71 // pred_fallthru
          _
        // Predicated region
        $region77: #{tpu_custom_call.1} parent=71 // pred_check
          %p455 = pneg %p74
        $region78: #{tpu_custom_call.1} parent=71 // pred_check_branch
          %457 = sbr.rel (%p455) target = $region80
        $region79: #{tpu_custom_call.1} parent=71 // pred_region
          %459 = dma.done [#allocation6], 2048
        $region80: #{tpu_custom_call.1} parent=71 // pred_fallthru
          _
        // Predicated region
        $region81: #{tpu_custom_call.1} parent=71 // pred_check
          %p460 = pneg %p95
        $region82: #{tpu_custom_call.1} parent=71 // pred_check_branch
          %462 = sbr.rel (%p460) target = $region84
        $region83: #{tpu_custom_call.1} parent=71 // pred_region
          %464 = dma.done [#allocation6], 2048
        $region84: #{tpu_custom_call.1} parent=71 // pred_fallthru
          _
        // Predicated region
        $region85: #{tpu_custom_call.1} parent=71 // pred_check
          %p465 = pneg %p116
        $region86: #{tpu_custom_call.1} parent=71 // pred_check_branch
          %467 = sbr.rel (%p465) target = $region88
        $region87: #{tpu_custom_call.1} parent=71 // pred_region
          %469 = dma.done [#allocation9], 2048
        $region88: #{tpu_custom_call.1} parent=71 // pred_fallthru
          _
        %s470 = sand.u32 %s40, 1
        %s471 = scalar_lea.sflag [#allocation3], %s470
        %s472 = sand.u32 %s40, 1
        %s473 = smul.addr %s472, 8
        %s474 = scalar_lea.vmem [#allocation2], %s473
        %p475 = pneg %p53
        %p476 = pneg %p50
        %p477 = pneg %p74
        %p478 = pneg %p71
        %p479 = pneg %p95
        %p480 = pneg %p92
        %p481 = pneg %p116
        %p482 = pneg %p113
        %p483 = pneg %p137
        %p484 = pneg %p134
        %p485 = pneg %p158
        %p486 = pneg %p155
        %p487 = pneg %p179
        %p488 = pneg %p176
        %p489 = pneg %p200
        %p490 = pneg %p197
        %p491 = pneg %p221
        %p492 = pneg %p218
        %p493 = pneg %p242
        %p494 = pneg %p239
        %p495 = pneg %p263
        %p496 = pneg %p260
        %p497 = pneg %p284
        %p498 = pneg %p281
        %p499 = pneg %p305
        %p500 = pneg %p302
        %p501 = pneg %p331
        %p502 = pneg %p328
        %s503 = sand.u32 %s318, 1
        %s504 = scalar_lea.sflag [#allocation4], %s503
        %s505 = sand.u32 %s318, 1
        %s506 = smul.addr %s505, 8
        %s507 = scalar_lea.vmem [#allocation10], %s506
        %v508 = vld [vmem:[%s449] sm:$0xff]
        %v509 = vld [vmem:[%s7] sm:$0x1]
        %v510 = vld [vmem:[%s10] sm:$0x1]
        %511 = vadd.xlane.f32.xlu0 %v508
        %v512 = vpop.xlane.xlu0 %511
        %v513 = vmul.f32 %v512, 0.03125
        %v514 = vmul.f32 %v508, %v508
        %515 = vadd.xlane.f32.xlu0 %v514
        %v516 = vpop.xlane.xlu0 %515
        %v517 = vmul.f32 %v516, 0.03125
        %v518 = vmul.f32 %v513, %v513
        %v519 = vsub.f32 %v517, %v518
        %v520 = vmax.f32 %v519, 0.0
        %v521 = vsub.f32 %v508, %v513
        %v522 = vadd.f32 %v520, 1e-05
        %v523 = vrsqrt.pop %v522
        %v524 = vmul.f32 %v523, %v522
        %v525 = vmul.f32 %v524, %v523
        %v526 = vmul.f32 0.5, %v525
        %v527 = vsub.f32 1.5, %v526
        %v528 = vmul.f32 %v523, %v527
        %vm529 = vweird.f32 %v522
        %vm530 = vweird.f32 %v523
        %vm531 = vmor %vm529, %vm530
        %v532 = vsel %vm531, %v523, %v528
        %v533 = vmul.f32 %v521, %v532
        %v535 = vperm.slane %v509, 0
        %v537 = vmul.f32 %v533, %v535
        %v539 = vperm.slane %v510, 0
        %v541 = vadd.f32 %v537, %v539
        %v542 = vmax.f32 %v541, 0.0
        %v543 = vld [vmem:[#allocation5] sm:$0xff]
        %v544 = vld [vmem:[#allocation5 + $0x8] sm:$0xff]
        %v545 = vld [vmem:[#allocation5 + $0x10] sm:$0xff]
        %v546 = vld [vmem:[#allocation5 + $0x18] sm:$0xff]
        %v547 = vld [vmem:[#allocation5 + $0x20] sm:$0xff]
        %v548 = vld [vmem:[#allocation5 + $0x28] sm:$0xff]
        %v549 = vld [vmem:[#allocation5 + $0x30] sm:$0xff]
        %v550 = vld [vmem:[#allocation5 + $0x38] sm:$0xff]
        %v551 = vld [vmem:[#allocation5 + $0x40] sm:$0xff]
        %v552 = vld [vmem:[#allocation5 + $0x48] sm:$0xff]
        %v553 = vld [vmem:[#allocation5 + $0x50] sm:$0xff]
        %v554 = vld [vmem:[#allocation5 + $0x58] sm:$0xff]
        %v555 = vld [vmem:[#allocation5 + $0x60] sm:$0xff]
        %v556 = vld [vmem:[#allocation5 + $0x68] sm:$0xff]
        %v557 = vld [vmem:[#allocation5 + $0x70] sm:$0xff]
        %v558 = vld [vmem:[#allocation5 + $0x78] sm:$0xff]
        %v559 = vld [vmem:[%s4] sm:$0x1]
        %v561 = vperm.slane %v559, 0
        %563 = vmatpush.msra.mxu0 %v558
        %564 = vmatpush.msra.mxu0 %v557
        %565 = vmatpush.msra.mxu0 %v556
        %566 = vmatpush.msra.mxu0 %v555
        %567 = vmatpush.msra.mxu0 %v554
        %568 = vmatpush.msra.mxu0 %v553
        %569 = vmatpush.msra.mxu0 %v552
        %570 = vmatpush.msra.mxu0 %v551
        %571 = vmatpush.msra.mxu0 %v550
        %572 = vmatpush.msra.mxu0 %v549
        %573 = vmatpush.msra.mxu0 %v548
        %574 = vmatpush.msra.mxu0 %v547
        %575 = vmatpush.msra.mxu0 %v546
        %576 = vmatpush.msra.mxu0 %v545
        %577 = vmatpush.msra.mxu0 %v544
        %578 = vmatpush.msra.mxu0 %v543
        %579 = vmatmul.f32.gmra.mxu0 %v542
        %v580 = vpop.f32.mrf.mxu0
        %v581 = vadd.f32 %v561, %v580
        %582 = vdwg.mxu0
        %v583 = vld [vmem:[%s8] sm:$0x1]
        %v584 = vld [vmem:[%s11] sm:$0x1]
        %585 = vadd.xlane.f32.xlu0 %v581
        %v586 = vpop.xlane.xlu0 %585
        %v587 = vmul.f32 %v586, 0.03125
        %v588 = vmul.f32 %v581, %v581
        %589 = vadd.xlane.f32.xlu0 %v588
        %v590 = vpop.xlane.xlu0 %589
        %v591 = vmul.f32 %v590, 0.03125
        %v592 = vmul.f32 %v587, %v587
        %v593 = vsub.f32 %v591, %v592
        %v594 = vmax.f32 %v593, 0.0
        %v595 = vsub.f32 %v581, %v587
        %v596 = vadd.f32 %v594, 1e-05
        %v597 = vrsqrt.pop %v596
        %v598 = vmul.f32 %v597, %v596
        %v599 = vmul.f32 %v598, %v597
        %v600 = vmul.f32 0.5, %v599
        %v601 = vsub.f32 1.5, %v600
        %v602 = vmul.f32 %v597, %v601
        %vm603 = vweird.f32 %v596
        %vm604 = vweird.f32 %v597
        %vm605 = vmor %vm603, %vm604
        %v606 = vsel %vm605, %v597, %v602
        %v607 = vmul.f32 %v595, %v606
        %v609 = vperm.slane %v583, 0
        %v611 = vmul.f32 %v607, %v609
        %v613 = vperm.slane %v584, 0
        %v615 = vadd.f32 %v611, %v613
        %v616 = vmax.f32 %v615, 0.0
        %v617 = vld [vmem:[#allocation7] sm:$0xff]
        %v618 = vld [vmem:[#allocation7 + $0x8] sm:$0xff]
        %v619 = vld [vmem:[#allocation7 + $0x10] sm:$0xff]
        %v620 = vld [vmem:[#allocation7 + $0x18] sm:$0xff]
        %v621 = vld [vmem:[#allocation7 + $0x20] sm:$0xff]
        %v622 = vld [vmem:[#allocation7 + $0x28] sm:$0xff]
        %v623 = vld [vmem:[#allocation7 + $0x30] sm:$0xff]
        %v624 = vld [vmem:[#allocation7 + $0x38] sm:$0xff]
        %v625 = vld [vmem:[#allocation7 + $0x40] sm:$0xff]
        %v626 = vld [vmem:[#allocation7 + $0x48] sm:$0xff]
        %v627 = vld [vmem:[#allocation7 + $0x50] sm:$0xff]
        %v628 = vld [vmem:[#allocation7 + $0x58] sm:$0xff]
        %v629 = vld [vmem:[#allocation7 + $0x60] sm:$0xff]
        %v630 = vld [vmem:[#allocation7 + $0x68] sm:$0xff]
        %v631 = vld [vmem:[#allocation7 + $0x70] sm:$0xff]
        %v632 = vld [vmem:[#allocation7 + $0x78] sm:$0xff]
        %v633 = vld [vmem:[%s5] sm:$0x1]
        %v635 = vperm.slane %v633, 0
        %637 = vmatpush.msra.mxu0 %v632
        %638 = vmatpush.msra.mxu0 %v631
        %639 = vmatpush.msra.mxu0 %v630
        %640 = vmatpush.msra.mxu0 %v629
        %641 = vmatpush.msra.mxu0 %v628
        %642 = vmatpush.msra.mxu0 %v627
        %643 = vmatpush.msra.mxu0 %v626
        %644 = vmatpush.msra.mxu0 %v625
        %645 = vmatpush.msra.mxu0 %v624
        %646 = vmatpush.msra.mxu0 %v623
        %647 = vmatpush.msra.mxu0 %v622
        %648 = vmatpush.msra.mxu0 %v621
        %649 = vmatpush.msra.mxu0 %v620
        %650 = vmatpush.msra.mxu0 %v619
        %651 = vmatpush.msra.mxu0 %v618
        %652 = vmatpush.msra.mxu0 %v617
        %653 = vmatmul.f32.gmra.mxu0 %v616
        %v654 = vpop.f32.mrf.mxu0
        %v655 = vadd.f32 %v635, %v654
        %656 = vdwg.mxu0
        %v657 = vld [vmem:[%s9] sm:$0x1]
        %v658 = vld [vmem:[%s12] sm:$0x1]
        %659 = vadd.xlane.f32.xlu0 %v655
        %v660 = vpop.xlane.xlu0 %659
        %v661 = vmul.f32 %v660, 0.03125
        %v662 = vmul.f32 %v655, %v655
        %663 = vadd.xlane.f32.xlu0 %v662
        %v664 = vpop.xlane.xlu0 %663
        %v665 = vmul.f32 %v664, 0.03125
        %v666 = vmul.f32 %v661, %v661
        %v667 = vsub.f32 %v665, %v666
        %v668 = vmax.f32 %v667, 0.0
        %v669 = vsub.f32 %v655, %v661
        %v670 = vadd.f32 %v668, 1e-05
        %v671 = vrsqrt.pop %v670
        %v672 = vmul.f32 %v671, %v670
        %v673 = vmul.f32 %v672, %v671
        %v674 = vmul.f32 0.5, %v673
        %v675 = vsub.f32 1.5, %v674
        %v676 = vmul.f32 %v671, %v675
        %vm677 = vweird.f32 %v670
        %vm678 = vweird.f32 %v671
        %vm679 = vmor %vm677, %vm678
        %v680 = vsel %vm679, %v671, %v676
        %v681 = vmul.f32 %v669, %v680
        %v683 = vperm.slane %v657, 0
        %v685 = vmul.f32 %v681, %v683
        %v687 = vperm.slane %v658, 0
        %v689 = vadd.f32 %v685, %v687
        %v690 = vmax.f32 %v689, 0.0
        %v691 = vld [vmem:[#allocation8] sm:$0xff]
        %v692 = vld [vmem:[#allocation8 + $0x8] sm:$0xff]
        %v693 = vld [vmem:[#allocation8 + $0x10] sm:$0xff]
        %v694 = vld [vmem:[#allocation8 + $0x18] sm:$0xff]
        %v695 = vld [vmem:[#allocation8 + $0x20] sm:$0xff]
        %v696 = vld [vmem:[#allocation8 + $0x28] sm:$0xff]
        %v697 = vld [vmem:[#allocation8 + $0x30] sm:$0xff]
        %v698 = vld [vmem:[#allocation8 + $0x38] sm:$0xff]
        %v699 = vld [vmem:[#allocation8 + $0x40] sm:$0xff]
        %v700 = vld [vmem:[#allocation8 + $0x48] sm:$0xff]
        %v701 = vld [vmem:[#allocation8 + $0x50] sm:$0xff]
        %v702 = vld [vmem:[#allocation8 + $0x58] sm:$0xff]
        %v703 = vld [vmem:[#allocation8 + $0x60] sm:$0xff]
        %v704 = vld [vmem:[#allocation8 + $0x68] sm:$0xff]
        %v705 = vld [vmem:[#allocation8 + $0x70] sm:$0xff]
        %v706 = vld [vmem:[#allocation8 + $0x78] sm:$0xff]
        %v707 = vld [vmem:[%s6] sm:$0x1]
        %v709 = vperm.slane %v707, 0
        %711 = vmatpush.msra.mxu0 %v706
        %712 = vmatpush.msra.mxu0 %v705
        %713 = vmatpush.msra.mxu0 %v704
        %714 = vmatpush.msra.mxu0 %v703
        %715 = vmatpush.msra.mxu0 %v702
        %716 = vmatpush.msra.mxu0 %v701
        %717 = vmatpush.msra.mxu0 %v700
        %718 = vmatpush.msra.mxu0 %v699
        %719 = vmatpush.msra.mxu0 %v698
        %720 = vmatpush.msra.mxu0 %v697
        %721 = vmatpush.msra.mxu0 %v696
        %722 = vmatpush.msra.mxu0 %v695
        %723 = vmatpush.msra.mxu0 %v694
        %724 = vmatpush.msra.mxu0 %v693
        %725 = vmatpush.msra.mxu0 %v692
        %726 = vmatpush.msra.mxu0 %v691
        %727 = vmatmul.f32.gmra.mxu0 %v690
        %v728 = vpop.f32.mrf.mxu0
        %v729 = vadd.f32 %v709, %v728
        %730 = vdwg.mxu0
        %731 = vst [vmem:[%s507] sm:$0xff] %v729
        %s732 = sand.u32 %s318, 1
        %s733 = scalar_lea.sflag [#allocation4], %s732
        %s734 = sand.u32 %s318, 1
        %s735 = smul.addr %s734, 8
        %s736 = scalar_lea.vmem [#allocation10], %s735
        // Predicated region
        $region89: #{tpu_custom_call.1} parent=71 // pred_check
          %p737 = pneg %p328
        $region90: #{tpu_custom_call.1} parent=71 // pred_check_branch
          %739 = sbr.rel (%p737) target = $region92
        $region91: #{tpu_custom_call.1} parent=71 // pred_region
          %741 = vsyncadd %s733, 0
          %s742 = smul.addr %s32, 8
          %s743 = scalar_lea.hbm %s13, %s742
          %s745 = sshll.u32 %s736, 4
          %s746 = int_to_ptr.vmem [resolvable:$true] %s745
          %s747 = sshll.u32 %s743, 4
          %s748 = int_to_ptr.hbm [resolvable:$true] %s747
          %750 = dma.vmem_to_hbm [thread:$0]  %s746, 128, %s748, %s733
        $region92: #{tpu_custom_call.1} parent=71 // pred_fallthru
          _
      $region72: #{tpu_custom_call.1} parent=5 // pred_fallthru
        _
      %p751 = scmp.le.s32.totalorder 2, %s27
      // Predicated region
      $region93: #{tpu_custom_call.1} parent=5 // pred_check
        %p752 = pneg %p751
      $region94: #{tpu_custom_call.1} parent=5 // pred_check_branch
        %754 = sbr.rel (%p752) target = $region96
      $region95: #{tpu_custom_call.1} parent=5 // pred_region
        %s755 = ssub.s32 %s27, 2
        // Predicated region
        $region97: #{tpu_custom_call.1} parent=95 // pred_check
          %p756 = pneg %p334
        $region98: #{tpu_custom_call.1} parent=95 // pred_check_branch
          %758 = sbr.rel (%p756) target = $region100
        $region99: #{tpu_custom_call.1} parent=95 // pred_region
          %s759 = sand.u32 %s319, 1
          %s760 = scalar_lea.sflag [#allocation4], %s759
          %s761 = sand.u32 %s319, 1
          %s762 = smul.addr %s761, 8
          %s763 = scalar_lea.vmem [#allocation10], %s762
          %765 = dma.done %s760, 128
        $region100: #{tpu_custom_call.1} parent=95 // pred_fallthru
          _
      $region96: #{tpu_custom_call.1} parent=5 // pred_fallthru
        _
    $region6: #{tpu_custom_call.1} parent=1 // loop_footer
      %s31 = sadd.s32 1, %s27
    $region7: #{tpu_custom_call.1} parent=1 // loop_footer_branch
      %26 = sbr.rel target = $region3
    $region8: #{tpu_custom_call.1} parent=1 // loop_exit
      _
    %766 = vsyncpa [#allocation3], 1
    %s767 = scalar_lea.sflag [#allocation3], 1
    %768 = vsyncpa %s767, 1
    %769 = vsyncpa [#allocation6], 1
    %770 = vsyncpa [#allocation9], 1
    %771 = vsyncpa [#allocation4], 1
    %s772 = scalar_lea.sflag [#allocation4], 1
    %773 = vsyncpa %s772, 1

</llo_original>
